<compile_context>
chip_gen: v7x
topology: tpu7x:2x2x1
jax: 0.10.0
libtpu: 0.0.40
codegen_flags: <defaults>
</compile_context>

<pallas_src>
import functools

import jax
import jax.numpy as jnp
from jax.experimental import pallas as pl
from jax.experimental.pallas import tpu as pltpu

H1 = 100      # fc1 out_features (PyTorch spec)
H2 = 50       # out layer features (PyTorch spec)
H1_PAD = 128  # lane-dense padded hidden (tanh(0)=0 on padded lanes)
H2_PAD = 64   # padded output lanes (sliced back to 50 by the consumer)


def fc_repr_kernel(x_ref, w1_ref, b1_ref, w2_ref, b2_ref, o_ref, *, act_dtype):
    # Two MXU matmuls with f32 accumulation; hidden tanh in act_dtype
    # (bf16 on v6e/v7x EUP, f32 on v5e), final bias+tanh+store in f32.
    x = x_ref[...]                                                  # (TB, D)
    h = jnp.dot(x, w1_ref[...], preferred_element_type=jnp.float32)  # (TB,128) f32
    h = jnp.tanh((h + b1_ref[...]).astype(act_dtype))                 # EUP tanh
    y = jnp.dot(h.astype(w2_ref.dtype), w2_ref[...],
                preferred_element_type=jnp.float32)                   # (TB,64) f32
    o_ref[...] = jnp.tanh(y + b2_ref[...])                            # f32 out


def _round_up(n, m):
    return ((n + m - 1) // m) * m


def _choose_batch_tile(B):
    """Large tile (amortize per-step overhead), multiple of 16 sublanes,
    capped at 4096 (v5e 16 MiB scoped VMEM), >=2 grid tiles when B allows
    (v7x megacore split over the 'parallel' batch axis)."""
    half = _round_up(max(1, (B + 1) // 2), 16)
    tb = max(16, min(4096, half))
    return tb, _round_up(B, tb)


def _default_act_dtype():
    # v5e has no bf16 VPU/EUP path -> keep hidden tanh in f32 there.
    try:
        kind = jax.devices()[0].device_kind.lower()
    except Exception:  # pragma: no cover - no device info
        return jnp.float32
    return jnp.float32 if "v5" in kind else jnp.bfloat16


def prepare_params(w1, b1, w2, b2, *, matmul_dtype=jnp.bfloat16):
    """One-time padding/casting of weights & biases (hoisted out of the call
    path).  w1:(D,100) b1:(1,100) w2:(100,50) b2:(1,50)."""
    D = w1.shape[0]
    assert w1.shape == (D, H1) and w2.shape == (H1, H2)
    w1p = jnp.zeros((D, H1_PAD), matmul_dtype).at[:, :H1].set(
        w1.astype(matmul_dtype))
    b1p = jnp.zeros((1, H1_PAD), jnp.float32).at[:, :H1].set(
        b1.reshape(1, H1).astype(jnp.float32))
    w2p = jnp.zeros((H1_PAD, H2_PAD), matmul_dtype).at[:H1, :H2].set(
        w2.astype(matmul_dtype))
    b2p = jnp.zeros((1, H2_PAD), jnp.float32).at[:, :H2].set(
        b2.reshape(1, H2).astype(jnp.float32))
    return w1p, b1p, w2p, b2p


def fc_representation_padded(x, params, *, act_dtype=None):
    """Returns the padded (B_pad, H2_PAD) f32 output block (rows >= B and
    lanes >= 50 are garbage-free padding: tanh(b2_pad)=tanh(0)=0 region)."""
    w1p, b1p, w2p, b2p = params
    matmul_dtype = w1p.dtype
    if act_dtype is None:
        act_dtype = (jnp.float32 if matmul_dtype == jnp.float32
                     else _default_act_dtype())

    B, D = x.shape
    TB, B_pad = _choose_batch_tile(B)

    # Fused pad + cast: single pass over x, allocated directly in matmul dtype.
    x_in = jnp.zeros((B_pad, D), matmul_dtype).at[:B, :].set(
        x.astype(matmul_dtype))

    itemsize = jnp.dtype(matmul_dtype).itemsize
    cost = pl.CostEstimate(
        flops=2 * B_pad * (D * H1_PAD + H1_PAD * H2_PAD),
        transcendentals=B_pad * (H1_PAD + H2_PAD),
        bytes_accessed=(x_in.size * itemsize
                        + (w1p.size + w2p.size) * itemsize
                        + (b1p.size + b2p.size) * 4
                        + B_pad * H2_PAD * 4),
    )

    kernel = functools.partial(fc_repr_kernel, act_dtype=act_dtype)

    return pl.pallas_call(
        kernel,
        out_shape=jax.ShapeDtypeStruct((B_pad, H2_PAD), jnp.float32),
        grid=(B_pad // TB,),
        in_specs=[
            pl.BlockSpec((TB, D), lambda i: (i, 0)),           # x: batch-streamed
            pl.BlockSpec((D, H1_PAD), lambda i: (0, 0)),       # w1: VMEM-resident
            pl.BlockSpec((1, H1_PAD), lambda i: (0, 0)),       # b1: VMEM-resident
            pl.BlockSpec((H1_PAD, H2_PAD), lambda i: (0, 0)),  # w2: VMEM-resident
            pl.BlockSpec((1, H2_PAD), lambda i: (0, 0)),       # b2: VMEM-resident
        ],
        out_specs=pl.BlockSpec((TB, H2_PAD), lambda i: (i, 0)),
        compiler_params=pltpu.CompilerParams(
            dimension_semantics=("parallel",)),  # v7x: 2 TCs split batch tiles
        cost_estimate=cost,
    )(x_in, w1p, b1p, w2p, b2p)


def fc_representation(x, params, *, act_dtype=None):
    """tanh(tanh(x @ w1 + b1) @ w2 + b2) -> (B, 50).
    NOTE: in production, consume fc_representation_padded() directly and fuse
    this slice into the next op to avoid an extra HBM pass over the output."""
    out_pad = fc_representation_padded(x, params, act_dtype=act_dtype)
    return out_pad[:x.shape[0], :H2]


def init_params(key, input_dim):
    # Mimic PyTorch nn.Linear default init: U(-1/sqrt(fan_in), 1/sqrt(fan_in)).
    k1, k2, k3, k4 = jax.random.split(key, 4)
    bound1 = 1.0 / jnp.sqrt(jnp.float32(input_dim))
    w1 = jax.random.uniform(k1, (input_dim, H1), jnp.float32, -bound1, bound1)
    b1 = jax.random.uniform(k2, (1, H1), jnp.float32, -bound1, bound1)
    bound2 = 1.0 / jnp.sqrt(jnp.float32(H1))
    w2 = jax.random.uniform(k3, (H1, H2), jnp.float32, -bound2, bound2)
    b2 = jax.random.uniform(k4, (1, H2), jnp.float32, -bound2, bound2)
    return w1, b1, w2, b2


if __name__ == "__main__":
    key = jax.random.PRNGKey(0)
    kx, kx2, kp = jax.random.split(key, 3)

    input_dim = 32
    w1, b1, w2, b2 = init_params(kp, input_dim)

    # Params padded/cast once (hoisted out of the call path).
    params_f32 = prepare_params(w1, b1, w2, b2, matmul_dtype=jnp.float32)
    params_bf16 = prepare_params(w1, b1, w2, b2, matmul_dtype=jnp.bfloat16)

    # --- small batch (single grid tile) ---
    x = jax.random.normal(kx, (2, input_dim), jnp.float32)
    ref = jnp.tanh(jnp.tanh(x @ w1 + b1) @ w2 + b2)

    out_f32 = jax.block_until_ready(fc_representation(x, params_f32))
    assert out_f32.shape == (2, H2)
    assert jnp.allclose(out_f32, ref, atol=1e-4, rtol=1e-4)

    out_bf16 = jax.block_until_ready(fc_representation(x, params_bf16))
    assert out_bf16.shape == (2, H2)
    assert jnp.allclose(out_bf16, ref, atol=5e-2, rtol=5e-2)

    # --- multi-tile batch (exercises TB/2-tile grid + ragged-row padding) ---
    x2 = jax.random.normal(kx2, (100, input_dim), jnp.float32)
    ref2 = jnp.tanh(jnp.tanh(x2 @ w1 + b1) @ w2 + b2)

    out2_f32 = jax.block_until_ready(fc_representation(x2, params_f32))
    assert out2_f32.shape == (100, H2)
    assert jnp.allclose(out2_f32, ref2, atol=1e-4, rtol=1e-4)

    out2_bf16 = jax.block_until_ready(fc_representation(x2, params_bf16))
    assert out2_bf16.shape == (100, H2)
    assert jnp.allclose(out2_bf16, ref2, atol=5e-2, rtol=5e-2)

    print("KERNEL_OK")
</pallas_src>

<mosaic_0001>
module attributes {stable_mosaic.version = 11 : i64} {
  func.func @fc_repr_kernel(%arg0: i32, %arg1: memref<16x32xf32, #tpu.memory_space<vmem>>, %arg2: memref<32x128xf32, #tpu.memory_space<vmem>>, %arg3: memref<1x128xf32, #tpu.memory_space<vmem>>, %arg4: memref<128x64xf32, #tpu.memory_space<vmem>>, %arg5: memref<1x64xf32, #tpu.memory_space<vmem>>, %arg6: memref<16x64xf32, #tpu.memory_space<vmem>>) attributes {dimension_semantics = [#tpu.dimension_semantics<parallel>], iteration_bounds = array<i64: 1>, scalar_prefetch = 0 : i64, scratch_operands = 0 : i64, tpu.core_type = #tpu.core_type<tc>, window_params = [{transform_indices = @transform_0, window_bounds = array<i64: 16, 32>}, {pipeline_mode = #tpu.pipeline_mode<synchronous>, transform_indices = @transform_1, window_bounds = array<i64: 32, 128>}, {pipeline_mode = #tpu.pipeline_mode<synchronous>, transform_indices = @transform_2, window_bounds = array<i64: 1, 128>}, {pipeline_mode = #tpu.pipeline_mode<synchronous>, transform_indices = @transform_3, window_bounds = array<i64: 128, 64>}, {pipeline_mode = #tpu.pipeline_mode<synchronous>, transform_indices = @transform_4, window_bounds = array<i64: 1, 64>}, {transform_indices = @transform_5, window_bounds = array<i64: 16, 64>}]} {
    %c0 = arith.constant 0 : index
    %c0_0 = arith.constant 0 : index
    %0 = vector.load %arg1[%c0, %c0_0] : memref<16x32xf32, #tpu.memory_space<vmem>>, vector<16x32xf32>
    %c0_1 = arith.constant 0 : index
    %c0_2 = arith.constant 0 : index
    %1 = vector.load %arg2[%c0_1, %c0_2] : memref<32x128xf32, #tpu.memory_space<vmem>>, vector<32x128xf32>
    %cst = arith.constant dense<0.000000e+00> : vector<16x128xf32>
    %2 = tpu.matmul %0, %1, %cst {dimension_numbers = #tpu.dot_dimension_numbers<[1], [0], [0], [1], [0, 0, 1, 1], [], []>} : vector<16x32xf32>, vector<32x128xf32>, vector<16x128xf32> -> vector<16x128xf32>
    %c0_3 = arith.constant 0 : index
    %c0_4 = arith.constant 0 : index
    %3 = vector.load %arg3[%c0_3, %c0_4] : memref<1x128xf32, #tpu.memory_space<vmem>>, vector<1x128xf32>
    %4 = vector.broadcast %3 : vector<1x128xf32> to vector<16x128xf32>
    %5 = arith.addf %2, %4 : vector<16x128xf32>
    %6 = math.tanh %5 : vector<16x128xf32>
    %c0_5 = arith.constant 0 : index
    %c0_6 = arith.constant 0 : index
    %7 = vector.load %arg4[%c0_5, %c0_6] : memref<128x64xf32, #tpu.memory_space<vmem>>, vector<128x64xf32>
    %cst_7 = arith.constant dense<0.000000e+00> : vector<16x64xf32>
    %8 = tpu.matmul %6, %7, %cst_7 {dimension_numbers = #tpu.dot_dimension_numbers<[1], [0], [0], [1], [0, 0, 1, 1], [], []>} : vector<16x128xf32>, vector<128x64xf32>, vector<16x64xf32> -> vector<16x64xf32>
    %c0_8 = arith.constant 0 : index
    %c0_9 = arith.constant 0 : index
    %9 = vector.load %arg5[%c0_8, %c0_9] : memref<1x64xf32, #tpu.memory_space<vmem>>, vector<1x64xf32>
    %10 = vector.broadcast %9 : vector<1x64xf32> to vector<16x64xf32>
    %11 = arith.addf %8, %10 : vector<16x64xf32>
    %12 = math.tanh %11 : vector<16x64xf32>
    %c0_10 = arith.constant 0 : index
    %c0_11 = arith.constant 0 : index
    %13 = vector.load %arg6[%c0_10, %c0_11] : memref<16x64xf32, #tpu.memory_space<vmem>>, vector<16x64xf32>
    tpu.vector_store %arg6[%c0_10, %c0_11], %12 {strides = array<i32>} : memref<16x64xf32, #tpu.memory_space<vmem>>, vector<16x64xf32>,
    return
  }
  func.func @transform_0(%arg0: i32) -> (i32, i32) {
    %c0_i32 = arith.constant 0 : i32
    %c0_i32_0 = arith.constant 0 : i32
    return %arg0, %c0_i32 : i32, i32
  }
  func.func @transform_1(%arg0: i32) -> (i32, i32) {
    %c0_i32 = arith.constant 0 : i32
    %c0_i32_0 = arith.constant 0 : i32
    %c0_i32_1 = arith.constant 0 : i32
    return %c0_i32, %c0_i32_0 : i32, i32
  }
  func.func @transform_2(%arg0: i32) -> (i32, i32) {
    %c0_i32 = arith.constant 0 : i32
    %c0_i32_0 = arith.constant 0 : i32
    %c0_i32_1 = arith.constant 0 : i32
    return %c0_i32, %c0_i32_0 : i32, i32
  }
  func.func @transform_3(%arg0: i32) -> (i32, i32) {
    %c0_i32 = arith.constant 0 : i32
    %c0_i32_0 = arith.constant 0 : i32
    %c0_i32_1 = arith.constant 0 : i32
    return %c0_i32, %c0_i32_0 : i32, i32
  }
  func.func @transform_4(%arg0: i32) -> (i32, i32) {
    %c0_i32 = arith.constant 0 : i32
    %c0_i32_0 = arith.constant 0 : i32
    %c0_i32_1 = arith.constant 0 : i32
    return %c0_i32, %c0_i32_0 : i32, i32
  }
  func.func @transform_5(%arg0: i32) -> (i32, i32) {
    %c0_i32 = arith.constant 0 : i32
    %c0_i32_0 = arith.constant 0 : i32
    return %arg0, %c0_i32 : i32, i32
  }
}

</mosaic_0001>

<llo_original>
// kernel: tpu_custom_call.1
$region0: #{tpu_custom_call.1}
  #allocation0 [shape = 'u32[]', space=smem, size = 0x4, offset = 0x4, fixed_abs, tag = 'smem constant byte address 0x4 - core index']
  #allocation1 [shape = 'u32[144,128]{1,0:T(1,128)}', space=vmem, size = 0x12000, scoped, tag = 'internal scratch']
  %s0 = inlined_call_operand.vmem [shape: f32[16,32], index: 0, kind: input, shape index: {}]
  %s1 = inlined_call_operand.vmem [shape: f32[32,128], index: 1, kind: input, shape index: {}]
  %s2 = inlined_call_operand.vmem [shape: f32[1,128], index: 2, kind: input, shape index: {}]
  %s3 = inlined_call_operand.vmem [shape: f32[128,64], index: 3, kind: input, shape index: {}]
  %s4 = inlined_call_operand.vmem [shape: f32[1,64], index: 4, kind: input, shape index: {}]
  %s5 = inlined_call_operand.hbm [shape: f32[16,64], index: 5, kind: output, shape index: {}]
  %s6 = sld [smem:[#allocation0]]
  $region30: #{tpu_custom_call.1} parent=0
    _
  %s8 = ssub.s32 1, %s6
  %s9 = scalar_select 0, %s8, %s6
  $region1: #{tpu_custom_call.1} parent=0
    #allocation2 [shape = 'u8[8192]{0}', space=vmem, size = 0x2000, scoped, tag = 'output window, operand 0, single buffered']
    #allocation3 [shape = 's32[1]{0}', space=sflag, size = 0x4, scoped, tag = 'scoped memory for tpu_custom_call.1']
    %10 = vsyncpa [#allocation3], 0
    // Predicated region
    $region2: #{tpu_custom_call.1} parent=1 // pred_check
      _
    $region3: #{tpu_custom_call.1} parent=1 // pred_check_branch
      %12 = sbr.rel (0) target = $region5
    $region4: #{tpu_custom_call.1} parent=1 // pred_region
      _
    $region5: #{tpu_custom_call.1} parent=1 // pred_fallthru
      _
    // Predicated region
    $region6: #{tpu_custom_call.1} parent=1 // pred_check
      _
    $region7: #{tpu_custom_call.1} parent=1 // pred_check_branch
      %14 = sbr.rel (0) target = $region9
    $region8: #{tpu_custom_call.1} parent=1 // pred_region
      _
    $region9: #{tpu_custom_call.1} parent=1 // pred_fallthru
      _
    // Predicated region
    $region10: #{tpu_custom_call.1} parent=1 // pred_check
      _
    $region11: #{tpu_custom_call.1} parent=1 // pred_check_branch
      %16 = sbr.rel (0) target = $region13
    $region12: #{tpu_custom_call.1} parent=1 // pred_region
      _
    $region13: #{tpu_custom_call.1} parent=1 // pred_fallthru
      _
    // Predicated region
    $region14: #{tpu_custom_call.1} parent=1 // pred_check
      _
    $region15: #{tpu_custom_call.1} parent=1 // pred_check_branch
      %18 = sbr.rel (0) target = $region17
    $region16: #{tpu_custom_call.1} parent=1 // pred_region
      _
    $region17: #{tpu_custom_call.1} parent=1 // pred_fallthru
      _
    // Predicated region
    $region18: #{tpu_custom_call.1} parent=1 // pred_check
      _
    $region19: #{tpu_custom_call.1} parent=1 // pred_check_branch
      %20 = sbr.rel (0) target = $region21
    $region20: #{tpu_custom_call.1} parent=1 // pred_region
      _
    $region21: #{tpu_custom_call.1} parent=1 // pred_fallthru
      _
    %v21 = vld [vmem:[%s0] sm:$0xff]
    %v22 = vld [vmem:[%s0 + $0x8] sm:$0xff]
    %v23 = vld [vmem:[%s1] sm:$0xff]
    %v24 = vld [vmem:[%s1 + $0x8] sm:$0xff]
    %v25 = vld [vmem:[%s1 + $0x10] sm:$0xff]
    %v26 = vld [vmem:[%s1 + $0x18] sm:$0xff]
    %v27 = vld [vmem:[%s2] sm:$0x1]
    %v29 = vlaneseq
    %v30 = vshrl.u32 %v29, 7
    %v31 = vsub.s32 0, %v30
    %v32 = vrot.slane %v27, %v31
    %vm34 = vcmask 261120
    %v36 = vsel %vm34, %v21, 0
    %v39 = vsel %vm34, %v22, 0
    %41 = vmatprep.subr.mxu0 0.0
    %42 = vmatpush1.msra.mxu0 %v23
    %43 = vmatprep.subr.mxu0 0.0
    %44 = vmatpush1.msra.mxu0 %v24
    %45 = vmatprep.subr.mxu0 0.0
    %46 = vmatpush1.msra.mxu0 %v25
    %47 = vmatprep.subr.mxu0 0.0
    %48 = vmatpush1.msra.mxu0 %v26
    %49 = vmatprep.subr.mxu0 0.0
    %50 = vmatpush1.msra.mxu0 0.0
    %51 = vmatprep.subr.mxu0 0.0
    %52 = vmatpush1.msra.mxu0 0.0
    %53 = vmatprep.subr.mxu0 0.0
    %54 = vmatpush1.msra.mxu0 0.0
    %55 = vmatprep.subr.mxu0 0.0
    %56 = vmatpush1.msra.mxu0 0.0
    %57 = vmatprep.subr.mxu0 0.0
    %58 = vmatpush1.msra.mxu0 0.0
    %59 = vmatprep.subr.mxu0 0.0
    %60 = vmatpush1.msra.mxu0 0.0
    %61 = vmatprep.subr.mxu0 0.0
    %62 = vmatpush1.msra.mxu0 0.0
    %63 = vmatprep.subr.mxu0 0.0
    %64 = vmatpush1.msra.mxu0 0.0
    %65 = vmatprep.subr.mxu0 0.0
    %66 = vmatpush1.msra.mxu0 0.0
    %67 = vmatprep.subr.mxu0 0.0
    %68 = vmatpush1.msra.mxu0 0.0
    %69 = vmatprep.subr.mxu0 0.0
    %70 = vmatpush1.msra.mxu0 0.0
    %71 = vmatprep.subr.mxu0 0.0
    %72 = vmatpush1.msra.mxu0 0.0
    %73 = vmatprep.subr.mxu0 0.0
    %74 = vmatpush1.msra.mxu0 0.0
    %75 = vmatprep.subr.mxu0 0.0
    %76 = vmatpush1.msra.mxu0 0.0
    %77 = vmatprep.subr.mxu0 0.0
    %78 = vmatpush1.msra.mxu0 0.0
    %79 = vmatprep.subr.mxu0 0.0
    %80 = vmatpush1.msra.mxu0 0.0
    %81 = vmatprep.subr.mxu0 0.0
    %82 = vmatpush1.msra.mxu0 0.0
    %83 = vmatprep.subr.mxu0 0.0
    %84 = vmatpush1.msra.mxu0 0.0
    %85 = vmatprep.subr.mxu0 0.0
    %86 = vmatpush1.msra.mxu0 0.0
    %87 = vmatprep.subr.mxu0 0.0
    %88 = vmatpush1.msra.mxu0 0.0
    %89 = vmatprep.subr.mxu0 0.0
    %90 = vmatpush1.msra.mxu0 0.0
    %91 = vmatprep.subr.mxu0 0.0
    %92 = vmatpush1.msra.mxu0 0.0
    %93 = vmatprep.subr.mxu0 0.0
    %94 = vmatpush1.msra.mxu0 0.0
    %95 = vmatprep.subr.mxu0 0.0
    %96 = vmatpush1.msra.mxu0 0.0
    %97 = vmatprep.subr.mxu0 0.0
    %98 = vmatpush1.msra.mxu0 0.0
    %99 = vmatprep.subr.mxu0 0.0
    %100 = vmatpush1.msra.mxu0 0.0
    %101 = vmatprep.subr.mxu0 0.0
    %102 = vmatpush1.msra.mxu0 0.0
    %103 = vmatprep.subr.mxu0 0.0
    %104 = vmatpush1.msra.mxu0 0.0
    %105 = vmatprep.mubr.f32.mxu0 0.0
    %106 = vmatmul.mubr.f32.gmra.mrb[0].mxu0 %v36
    %v107 = vpop.f32.mrb[0].mxu0
    %v108 = vadd.f32 %v32, %v107
    %v109 = vpop.f32.mrb[0].mxu0
    %110 = vmatprep.mubr.f32.mxu0 0.0
    %111 = vmatmul.mubr.f32.gmra.mrb[0].mxu0 %v39
    %v112 = vpop.f32.mrb[0].mxu0
    %v113 = vadd.f32 %v32, %v112
    %v114 = vpop.f32.mrb[0].mxu0
    %115 = vdwg.mxu0
    %v116 = vtanh.pop %v108
    %v117 = vtanh.pop %v113
    %v118 = vld [vmem:[%s3] sm:$0xff]
    %v119 = vld [vmem:[%s3 + $0x8] sm:$0xff]
    %v120 = vld [vmem:[%s3 + $0x10] sm:$0xff]
    %v121 = vld [vmem:[%s3 + $0x18] sm:$0xff]
    %v122 = vld [vmem:[%s3 + $0x20] sm:$0xff]
    %v123 = vld [vmem:[%s3 + $0x28] sm:$0xff]
    %v124 = vld [vmem:[%s3 + $0x30] sm:$0xff]
    %v125 = vld [vmem:[%s3 + $0x38] sm:$0xff]
    %v126 = vld [vmem:[%s3 + $0x40] sm:$0xff]
    %v127 = vld [vmem:[%s3 + $0x48] sm:$0xff]
    %v128 = vld [vmem:[%s3 + $0x50] sm:$0xff]
    %v129 = vld [vmem:[%s3 + $0x58] sm:$0xff]
    %v130 = vld [vmem:[%s3 + $0x60] sm:$0xff]
    %v131 = vld [vmem:[%s3 + $0x68] sm:$0xff]
    %v132 = vld [vmem:[%s3 + $0x70] sm:$0xff]
    %v133 = vld [vmem:[%s3 + $0x78] sm:$0xff]
    %v134 = vld [vmem:[%s4] sm:$0x1]
    %v136 = vlaneseq
    %v137 = vshrl.u32 %v136, 7
    %v138 = vsub.s32 0, %v137
    %v139 = vrot.slane %v134, %v138
    %141 = vmatprep.subr.mxu0 0.0
    %142 = vmatpush1.msra.mxu0 %v118
    %143 = vmatprep.subr.mxu0 0.0
    %144 = vmatpush1.msra.mxu0 %v119
    %145 = vmatprep.subr.mxu0 0.0
    %146 = vmatpush1.msra.mxu0 %v120
    %147 = vmatprep.subr.mxu0 0.0
    %148 = vmatpush1.msra.mxu0 %v121
    %149 = vmatprep.subr.mxu0 0.0
    %150 = vmatpush1.msra.mxu0 %v122
    %151 = vmatprep.subr.mxu0 0.0
    %152 = vmatpush1.msra.mxu0 %v123
    %153 = vmatprep.subr.mxu0 0.0
    %154 = vmatpush1.msra.mxu0 %v124
    %155 = vmatprep.subr.mxu0 0.0
    %156 = vmatpush1.msra.mxu0 %v125
    %157 = vmatprep.subr.mxu0 0.0
    %158 = vmatpush1.msra.mxu0 %v126
    %159 = vmatprep.subr.mxu0 0.0
    %160 = vmatpush1.msra.mxu0 %v127
    %161 = vmatprep.subr.mxu0 0.0
    %162 = vmatpush1.msra.mxu0 %v128
    %163 = vmatprep.subr.mxu0 0.0
    %164 = vmatpush1.msra.mxu0 %v129
    %165 = vmatprep.subr.mxu0 0.0
    %166 = vmatpush1.msra.mxu0 %v130
    %167 = vmatprep.subr.mxu0 0.0
    %168 = vmatpush1.msra.mxu0 %v131
    %169 = vmatprep.subr.mxu0 0.0
    %170 = vmatpush1.msra.mxu0 %v132
    %171 = vmatprep.subr.mxu0 0.0
    %172 = vmatpush1.msra.mxu0 %v133
    %173 = vmatprep.subr.mxu0 0.0
    %174 = vmatpush1.msra.mxu0 0.0
    %175 = vmatprep.subr.mxu0 0.0
    %176 = vmatpush1.msra.mxu0 0.0
    %177 = vmatprep.subr.mxu0 0.0
    %178 = vmatpush1.msra.mxu0 0.0
    %179 = vmatprep.subr.mxu0 0.0
    %180 = vmatpush1.msra.mxu0 0.0
    %181 = vmatprep.subr.mxu0 0.0
    %182 = vmatpush1.msra.mxu0 0.0
    %183 = vmatprep.subr.mxu0 0.0
    %184 = vmatpush1.msra.mxu0 0.0
    %185 = vmatprep.subr.mxu0 0.0
    %186 = vmatpush1.msra.mxu0 0.0
    %187 = vmatprep.subr.mxu0 0.0
    %188 = vmatpush1.msra.mxu0 0.0
    %189 = vmatprep.subr.mxu0 0.0
    %190 = vmatpush1.msra.mxu0 0.0
    %191 = vmatprep.subr.mxu0 0.0
    %192 = vmatpush1.msra.mxu0 0.0
    %193 = vmatprep.subr.mxu0 0.0
    %194 = vmatpush1.msra.mxu0 0.0
    %195 = vmatprep.subr.mxu0 0.0
    %196 = vmatpush1.msra.mxu0 0.0
    %197 = vmatprep.subr.mxu0 0.0
    %198 = vmatpush1.msra.mxu0 0.0
    %199 = vmatprep.subr.mxu0 0.0
    %200 = vmatpush1.msra.mxu0 0.0
    %201 = vmatprep.subr.mxu0 0.0
    %202 = vmatpush1.msra.mxu0 0.0
    %203 = vmatprep.subr.mxu0 0.0
    %204 = vmatpush1.msra.mxu0 0.0
    %205 = vmatprep.mubr.f32.mxu0 0.0
    %206 = vmatmul.mubr.f32.gmra.mrb[0].mxu0 %v116
    %v207 = vpop.f32.mrb[0].mxu0
    %v208 = vadd.f32 %v139, %v207
    %v209 = vpop.f32.mrb[0].mxu0
    %210 = vmatprep.mubr.f32.mxu0 0.0
    %211 = vmatmul.mubr.f32.gmra.mrb[0].mxu0 %v117
    %v212 = vpop.f32.mrb[0].mxu0
    %v213 = vadd.f32 %v139, %v212
    %v214 = vpop.f32.mrb[0].mxu0
    %215 = vdwg.mxu0
    %v216 = vtanh.pop %v208
    %v217 = vtanh.pop %v213
    %vm218 = vcmask 523264
    %219 = vst.msk [vmem:[#allocation2] sm:$0xff] %vm218, %v216
    %220 = vst.msk [vmem:[#allocation2 + $0x8] sm:$0xff] %vm218, %v217
    // Predicated region
    $region22: #{tpu_custom_call.1} parent=1 // pred_check
      _
    $region23: #{tpu_custom_call.1} parent=1 // pred_check_branch
      %222 = sbr.rel (0) target = $region25
    $region24: #{tpu_custom_call.1} parent=1 // pred_region
      %s224 = ssub.s32 256, 256
      %225 = vsyncadd [#allocation3], %s224
      %s226 = sshll.u32 [#allocation2], 4
      %s227 = int_to_ptr.vmem [resolvable:$true] %s226
      %232 = dma.vmem_to_hbm [thread:$0]  %s227, 256, %s5, [#allocation3], 128, 128, 8
    $region25: #{tpu_custom_call.1} parent=1 // pred_fallthru
      _
    // Predicated region
    $region26: #{tpu_custom_call.1} parent=1 // pred_check
      _
    $region27: #{tpu_custom_call.1} parent=1 // pred_check_branch
      %234 = sbr.rel (0) target = $region29
    $region28: #{tpu_custom_call.1} parent=1 // pred_region
      %235 = dma.done [#allocation3], 256
    $region29: #{tpu_custom_call.1} parent=1 // pred_fallthru
      _
    %236 = vsyncpa [#allocation3], 1

</llo_original>
